<compile_context>
chip_gen: v5e
topology: v5e:2x2
jax: 0.10.0
libtpu: 0.0.40
codegen_flags: <defaults>
</compile_context>

<pallas_src>
import functools

import jax
import jax.numpy as jnp
from jax.experimental import pallas as pl
from jax.experimental.pallas import tpu as pltpu

HIDDEN = 64                      # fc hidden width (fixed by the PyTorch module)
FUSED = 2 * HIDDEN               # 128 = fused state+advantage stream width


def _round_up(x, m):
    return ((x + m - 1) // m) * m


# --------------------------------------------------------------------------- #
# Kernel
# --------------------------------------------------------------------------- #
def dueling_q_kernel(x_ref, p_ref, out_ref, *, state_size, s_pad):
    """x_ref: (TM, S) f32; p_ref: packed (Sp+272, 128) f32 slab; out: (TM, 128)."""
    S, Sp = state_size, s_pad
    r2 = Sp + 8                  # start row of fused layer-2 weight (bias in row 127)
    r3 = r2 + FUSED              # start row of folded layer-3 weight

    x = x_ref[...]                                   # (TM, S)

    # Static, tile-aligned views into the single packed slab (no extra DMAs).
    w1 = p_ref[0:S, :]                               # (S, 128)   [W1 | 0]
    b1 = p_ref[Sp:Sp + 1, :]                         # (1, 128)   [b1 | 0 ... 0 | 1]
    w2 = p_ref[r2:r2 + FUSED, :]                     # (128, 128) [[ws1|wa1];0;[bs1|ba1]]
    w3 = p_ref[r3:r3 + FUSED, :]                     # (128, 128) dueling-folded weight
    b3 = p_ref[r3 + FUSED:r3 + FUSED + 1, :]         # (1, 128)   dueling-folded bias

    # Shared trunk. cols 64..126 are 0; col 127 is the constant-1 bias carrier.
    h = jnp.maximum(
        jnp.dot(x, w1, preferred_element_type=jnp.float32) + b1, 0.0)   # (TM,128)

    # Fused first layers of both streams (bias rides in w2 row 127 via carrier):
    #   cols 0..63   = relu(h_trunk @ ws1 + bs1)   (state stream)
    #   cols 64..127 = relu(h_trunk @ wa1 + ba1)   (advantage stream)
    g = jnp.maximum(
        jnp.dot(h, w2, preferred_element_type=jnp.float32), 0.0)        # (TM,128)

    # Folded second layers + dueling combine: lanes 0..A-1 are Q, rest are 0.
    out_ref[...] = jnp.dot(g, w3, preferred_element_type=jnp.float32) + b3


# --------------------------------------------------------------------------- #
# Host-side parameter packing (done ONCE at init, reused for every forward)
# --------------------------------------------------------------------------- #
def pack_params(p, state_size, action_size):
    """Pack all weights/biases into one lane-dense (Sp+272, 128) f32 slab."""
    H, Hp, A = HIDDEN, FUSED, action_size
    assert A <= Hp, "pack_params assumes action_size <= 128"
    Sp = _round_up(state_size, 8)
    r2 = Sp + 8
    r3 = r2 + Hp
    rows = r3 + Hp + 8
    slab = jnp.zeros((rows, Hp), jnp.float32)

    # --- layer 1: fc1, zero-padded to 128 output cols; lane 127 = bias carrier
    slab = slab.at[0:state_size, 0:H].set(p["w1"])
    slab = slab.at[Sp, 0:H].set(p["b1"].reshape(-1))
    slab = slab.at[Sp, Hp - 1].set(1.0)              # h[:, 127] == relu(1) == 1

    # --- layer 2: fused [fc_state1 | fc_advantange1]; bias rides in row 127 ---
    slab = slab.at[r2:r2 + H, 0:H].set(p["ws1"])
    slab = slab.at[r2:r2 + H, H:Hp].set(p["wa1"])
    slab = slab.at[r2 + Hp - 1, 0:H].set(p["bs1"].reshape(-1))
    slab = slab.at[r2 + Hp - 1, H:Hp].set(p["ba1"].reshape(-1))

    # --- layer 3: dueling combine folded into the weight/bias -----------------
    #   o[:, j] = g_state @ ws2 + g_adv @ (wa2[:, j] - mean_k wa2[:, k])
    #             + (bs2 + ba2[j] - mean(ba2))
    #           = sv + adv_j - mean(adv)            == Q[:, j]
    ws2 = p["ws2"].reshape(H, 1)                     # (64, 1)
    wa2 = p["wa2"]                                   # (64, A)
    bs2 = p["bs2"].reshape(())                       # scalar
    ba2 = p["ba2"].reshape(-1)                       # (A,)
    wa2_centered = wa2 - wa2.mean(axis=1, keepdims=True)
    b3_folded = bs2 + ba2 - ba2.mean()

    slab = slab.at[r3:r3 + H, 0:A].set(jnp.broadcast_to(ws2, (H, A)))
    slab = slab.at[r3 + H:r3 + Hp, 0:A].set(wa2_centered)
    slab = slab.at[r3 + Hp, 0:A].set(b3_folded)
    return slab


# --------------------------------------------------------------------------- #
# Wrapper
# --------------------------------------------------------------------------- #
def dueling_q_forward(state, packed, *, state_size, action_size):
    """state: (64, state_size) f32, packed: pack_params(...) slab.
    Returns (64, action_size) f32."""
    batch, s = state.shape
    # PyTorch forward hard-codes .expand(64, action_size) => batch must be 64.
    assert batch == 64, "DuelingQNetwork.forward requires batch == 64"
    assert s == state_size
    Sp = _round_up(state_size, 8)

    TM = 64                       # rows per grid step (one block for batch==64)
    assert batch % TM == 0

    kernel = functools.partial(
        dueling_q_kernel, state_size=state_size, s_pad=Sp)

    # Advisory cost hint so XLA schedules this tiny call sensibly.
    flops = 2 * batch * FUSED * (state_size + FUSED + FUSED)
    bytes_accessed = 4 * (state.size + packed.size + batch * FUSED)

    q_full = pl.pallas_call(
        kernel,
        out_shape=jax.ShapeDtypeStruct((batch, FUSED), jnp.float32),
        grid=(batch // TM,),
        in_specs=[
            pl.BlockSpec((TM, state_size), lambda i: (i, 0)),
            pl.BlockSpec(packed.shape, lambda i: (0, 0)),   # slab resident / DMA'd once
        ],
        out_specs=pl.BlockSpec((TM, FUSED), lambda i: (i, 0)),
        compiler_params=pltpu.CompilerParams(
            dimension_semantics=("parallel",)),
        cost_estimate=pl.CostEstimate(
            flops=flops, transcendentals=0, bytes_accessed=bytes_accessed),
    )(state, packed)

    # Lane-dense kernel output; cheap XLA slice down to the A action columns.
    return q_full[:, :action_size]


# --------------------------------------------------------------------------- #
# Init + pure-JAX reference
# --------------------------------------------------------------------------- #
def init_params(key, state_size, action_size, hidden=HIDDEN):
    """Deterministic synthetic init (uniform ~ PyTorch Linear default scale)."""
    def linear(key, fan_in, fan_out):
        kw, kb = jax.random.split(key)
        bound = 1.0 / jnp.sqrt(fan_in)
        w = jax.random.uniform(kw, (fan_in, fan_out), jnp.float32, -bound, bound)
        b = jax.random.uniform(kb, (1, fan_out), jnp.float32, -bound, bound)
        return w, b

    k1, k2, k3, k4, k5 = jax.random.split(key, 5)
    w1, b1 = linear(k1, state_size, hidden)          # fc1
    ws1, bs1 = linear(k2, hidden, hidden)            # fc_state1
    ws2, bs2 = linear(k3, hidden, 1)                 # fc_state2
    wa1, ba1 = linear(k4, hidden, hidden)            # fc_advantange1
    wa2, ba2 = linear(k5, hidden, action_size)       # fc_advantange2
    return dict(w1=w1, b1=b1, ws1=ws1, bs1=bs1, ws2=ws2, bs2=bs2,
                wa1=wa1, ba1=ba1, wa2=wa2, ba2=ba2)


def reference_forward(state, p):
    """Pure-JAX reference matching the PyTorch forward."""
    h = jax.nn.relu(state @ p["w1"] + p["b1"])
    sv = jax.nn.relu(h @ p["ws1"] + p["bs1"])
    sv = sv @ p["ws2"] + p["bs2"]                    # (64, 1)
    adv = jax.nn.relu(h @ p["wa1"] + p["ba1"])
    adv = adv @ p["wa2"] + p["ba2"]                  # (64, A)
    return sv + adv - adv.mean(axis=1, keepdims=True)


if __name__ == "__main__":
    BATCH = 64          # fixed by the PyTorch .expand(64, action_size)
    STATE_SIZE = 8
    ACTION_SIZE = 4

    key = jax.random.PRNGKey(0)
    k_params, k_state = jax.random.split(key)

    params = init_params(k_params, STATE_SIZE, ACTION_SIZE)
    packed = pack_params(params, STATE_SIZE, ACTION_SIZE)   # packed once, not per call
    state = jax.random.normal(k_state, (BATCH, STATE_SIZE), jnp.float32)

    q = dueling_q_forward(state, packed,
                          state_size=STATE_SIZE, action_size=ACTION_SIZE)
    q = jax.block_until_ready(q)

    q_ref = reference_forward(state, params)
    assert q.shape == (BATCH, ACTION_SIZE)
    # Folding the dueling combine into the packed matmul reassociates the sums;
    # agreement is ~1e-6, so compare at 1e-4.
    assert jnp.allclose(q, q_ref, atol=1e-4, rtol=1e-4), "mismatch vs reference"

    print("KERNEL_OK")
</pallas_src>

<mosaic_0001>
module attributes {stable_mosaic.version = 11 : i64} {
  func.func @dueling_q_kernel(%arg0: i32, %arg1: memref<64x8xf32, #tpu.memory_space<vmem>>, %arg2: memref<280x128xf32, #tpu.memory_space<vmem>>, %arg3: memref<64x128xf32, #tpu.memory_space<vmem>>) attributes {dimension_semantics = [#tpu.dimension_semantics<parallel>], iteration_bounds = array<i64: 1>, scalar_prefetch = 0 : i64, scratch_operands = 0 : i64, tpu.core_type = #tpu.core_type<tc>, window_params = [{transform_indices = @transform_0, window_bounds = array<i64: 64, 8>}, {pipeline_mode = #tpu.pipeline_mode<synchronous>, transform_indices = @transform_1, window_bounds = array<i64: 280, 128>}, {transform_indices = @transform_2, window_bounds = array<i64: 64, 128>}]} {
    %c0 = arith.constant 0 : index
    %c0_0 = arith.constant 0 : index
    %0 = vector.load %arg1[%c0, %c0_0] : memref<64x8xf32, #tpu.memory_space<vmem>>, vector<64x8xf32>
    %c0_1 = arith.constant 0 : index
    %c0_2 = arith.constant 0 : index
    %1 = vector.load %arg2[%c0_1, %c0_2] : memref<280x128xf32, #tpu.memory_space<vmem>>, vector<8x128xf32>
    %c8 = arith.constant 8 : index
    %c0_3 = arith.constant 0 : index
    %2 = vector.load %arg2[%c8, %c0_3] : memref<280x128xf32, #tpu.memory_space<vmem>>, vector<1x128xf32>
    %c16 = arith.constant 16 : index
    %c0_4 = arith.constant 0 : index
    %3 = vector.load %arg2[%c16, %c0_4] : memref<280x128xf32, #tpu.memory_space<vmem>>, vector<128x128xf32>
    %c144 = arith.constant 144 : index
    %c0_5 = arith.constant 0 : index
    %4 = vector.load %arg2[%c144, %c0_5] : memref<280x128xf32, #tpu.memory_space<vmem>>, vector<128x128xf32>
    %c272 = arith.constant 272 : index
    %c0_6 = arith.constant 0 : index
    %5 = vector.load %arg2[%c272, %c0_6] : memref<280x128xf32, #tpu.memory_space<vmem>>, vector<1x128xf32>
    %cst = arith.constant dense<0.000000e+00> : vector<64x128xf32>
    %6 = tpu.matmul %0, %1, %cst {dimension_numbers = #tpu.dot_dimension_numbers<[1], [0], [0], [1], [0, 0, 1, 1], [], []>} : vector<64x8xf32>, vector<8x128xf32>, vector<64x128xf32> -> vector<64x128xf32>
    %7 = vector.broadcast %2 : vector<1x128xf32> to vector<64x128xf32>
    %8 = arith.addf %6, %7 : vector<64x128xf32>
    %cst_7 = arith.constant 0.000000e+00 : f32
    %9 = vector.broadcast %cst_7 : f32 to vector<64x128xf32>
    %10 = arith.maximumf %8, %9 : vector<64x128xf32>
    %cst_8 = arith.constant dense<0.000000e+00> : vector<64x128xf32>
    %11 = tpu.matmul %10, %3, %cst_8 {dimension_numbers = #tpu.dot_dimension_numbers<[1], [0], [0], [1], [0, 0, 1, 1], [], []>} : vector<64x128xf32>, vector<128x128xf32>, vector<64x128xf32> -> vector<64x128xf32>
    %cst_9 = arith.constant 0.000000e+00 : f32
    %12 = vector.broadcast %cst_9 : f32 to vector<64x128xf32>
    %13 = arith.maximumf %11, %12 : vector<64x128xf32>
    %cst_10 = arith.constant dense<0.000000e+00> : vector<64x128xf32>
    %14 = tpu.matmul %13, %4, %cst_10 {dimension_numbers = #tpu.dot_dimension_numbers<[1], [0], [0], [1], [0, 0, 1, 1], [], []>} : vector<64x128xf32>, vector<128x128xf32>, vector<64x128xf32> -> vector<64x128xf32>
    %15 = vector.broadcast %5 : vector<1x128xf32> to vector<64x128xf32>
    %16 = arith.addf %14, %15 : vector<64x128xf32>
    %c0_11 = arith.constant 0 : index
    %c0_12 = arith.constant 0 : index
    %17 = vector.load %arg3[%c0_11, %c0_12] : memref<64x128xf32, #tpu.memory_space<vmem>>, vector<64x128xf32>
    tpu.vector_store %arg3[%c0_11, %c0_12], %16 {strides = array<i32>} : memref<64x128xf32, #tpu.memory_space<vmem>>, vector<64x128xf32>,
    return
  }
  func.func @transform_0(%arg0: i32) -> (i32, i32) {
    %c0_i32 = arith.constant 0 : i32
    %c0_i32_0 = arith.constant 0 : i32
    return %arg0, %c0_i32 : i32, i32
  }
  func.func @transform_1(%arg0: i32) -> (i32, i32) {
    %c0_i32 = arith.constant 0 : i32
    %c0_i32_0 = arith.constant 0 : i32
    %c0_i32_1 = arith.constant 0 : i32
    return %c0_i32, %c0_i32_0 : i32, i32
  }
  func.func @transform_2(%arg0: i32) -> (i32, i32) {
    %c0_i32 = arith.constant 0 : i32
    %c0_i32_0 = arith.constant 0 : i32
    return %arg0, %c0_i32 : i32, i32
  }
}

</mosaic_0001>

<llo_original>
// kernel: tpu_custom_call.1
$region0: #{tpu_custom_call.1}
  #allocation0 [shape = 'u32[]', space=smem, size = 0x4, offset = 0x4, fixed_abs, tag = 'smem constant byte address 0x4 - core index']
  #allocation1 [shape = 'u32[72,128]{1,0:T(1,128)}', space=vmem, size = 0x9000, scoped, tag = 'internal scratch']
  %s0 = inlined_call_operand.vmem [shape: f32[64,8], index: 0, kind: input, shape index: {}]
  %s1 = inlined_call_operand.hbm [shape: f32[280,128], index: 1, kind: input, shape index: {}]
  %s2 = inlined_call_operand.hbm [shape: f32[64,128], index: 2, kind: output, shape index: {}]
  %s3 = sld [smem:[#allocation0]]
  $region22: #{tpu_custom_call.1} parent=0
    _
  %s5 = ssub.s32 1, %s3
  %s6 = scalar_select 0, %s5, %s3
  $region1: #{tpu_custom_call.1} parent=0
    #allocation2 [shape = 'u8[143360]{0}', space=vmem, size = 0x23000, scoped, tag = 'input window, operand 1, single buffered']
    #allocation3 [shape = 's32[1]{0}', space=sflag, size = 0x4, scoped, tag = 'scoped memory for tpu_custom_call.1']
    #allocation4 [shape = 's32[1]{0}', space=sflag, size = 0x4, scoped, tag = 'scoped memory for tpu_custom_call.1']
    #allocation5 [shape = 'u8[32768]{0}', space=vmem, size = 0x8000, scoped, tag = 'output window, operand 0, single buffered']
    %7 = vsyncpa [#allocation3], 0
    %8 = vsyncpa [#allocation4], 0
    // Predicated region
    $region2: #{tpu_custom_call.1} parent=1 // pred_check
      _
    $region3: #{tpu_custom_call.1} parent=1 // pred_check_branch
      %10 = sbr.rel (0) target = $region5
    $region4: #{tpu_custom_call.1} parent=1 // pred_region
      _
    $region5: #{tpu_custom_call.1} parent=1 // pred_fallthru
      _
    // Predicated region
    $region6: #{tpu_custom_call.1} parent=1 // pred_check
      _
    $region7: #{tpu_custom_call.1} parent=1 // pred_check_branch
      %12 = sbr.rel (0) target = $region9
    $region8: #{tpu_custom_call.1} parent=1 // pred_region
      %14 = vsyncadd [#allocation3], 0
      %s15 = sshll.u32 %s1, 4
      %s16 = int_to_ptr.hbm [resolvable:$true] %s15
      %s17 = sshll.u32 [#allocation2], 4
      %s18 = int_to_ptr.vmem [resolvable:$true] %s17
      %23 = dma.hbm_to_vmem [thread:$0]  %s16, 4480, %s18, [#allocation3], 128, 128, 8
    $region9: #{tpu_custom_call.1} parent=1 // pred_fallthru
      _
    // Predicated region
    $region10: #{tpu_custom_call.1} parent=1 // pred_check
      _
    $region11: #{tpu_custom_call.1} parent=1 // pred_check_branch
      %25 = sbr.rel (0) target = $region13
    $region12: #{tpu_custom_call.1} parent=1 // pred_region
      %27 = dma.done [#allocation3], 4480
    $region13: #{tpu_custom_call.1} parent=1 // pred_fallthru
      _
    %v28 = vld [vmem:[%s0] sm:$0xff]
    %v29 = vld [vmem:[%s0 + $0x8] sm:$0xff]
    %v30 = vld [vmem:[%s0 + $0x10] sm:$0xff]
    %v31 = vld [vmem:[%s0 + $0x18] sm:$0xff]
    %v32 = vld [vmem:[%s0 + $0x20] sm:$0xff]
    %v33 = vld [vmem:[%s0 + $0x28] sm:$0xff]
    %v34 = vld [vmem:[%s0 + $0x30] sm:$0xff]
    %v35 = vld [vmem:[%s0 + $0x38] sm:$0xff]
    %v36 = vld [vmem:[#allocation2] sm:$0xff]
    %v37 = vld [vmem:[#allocation2 + $0x8] sm:$0x1]
    %v38 = vld [vmem:[#allocation2 + $0x10] sm:$0xff]
    %v39 = vld [vmem:[#allocation2 + $0x18] sm:$0xff]
    %v40 = vld [vmem:[#allocation2 + $0x20] sm:$0xff]
    %v41 = vld [vmem:[#allocation2 + $0x28] sm:$0xff]
    %v42 = vld [vmem:[#allocation2 + $0x30] sm:$0xff]
    %v43 = vld [vmem:[#allocation2 + $0x38] sm:$0xff]
    %v44 = vld [vmem:[#allocation2 + $0x40] sm:$0xff]
    %v45 = vld [vmem:[#allocation2 + $0x48] sm:$0xff]
    %v46 = vld [vmem:[#allocation2 + $0x50] sm:$0xff]
    %v47 = vld [vmem:[#allocation2 + $0x58] sm:$0xff]
    %v48 = vld [vmem:[#allocation2 + $0x60] sm:$0xff]
    %v49 = vld [vmem:[#allocation2 + $0x68] sm:$0xff]
    %v50 = vld [vmem:[#allocation2 + $0x70] sm:$0xff]
    %v51 = vld [vmem:[#allocation2 + $0x78] sm:$0xff]
    %v52 = vld [vmem:[#allocation2 + $0x80] sm:$0xff]
    %v53 = vld [vmem:[#allocation2 + $0x88] sm:$0xff]
    %v54 = vld [vmem:[#allocation2 + $0x90] sm:$0xff]
    %v55 = vld [vmem:[#allocation2 + $0x98] sm:$0xff]
    %v56 = vld [vmem:[#allocation2 + $0xa0] sm:$0xff]
    %v57 = vld [vmem:[#allocation2 + $0xa8] sm:$0xff]
    %v58 = vld [vmem:[#allocation2 + $0xb0] sm:$0xff]
    %v59 = vld [vmem:[#allocation2 + $0xb8] sm:$0xff]
    %v60 = vld [vmem:[#allocation2 + $0xc0] sm:$0xff]
    %v61 = vld [vmem:[#allocation2 + $0xc8] sm:$0xff]
    %v62 = vld [vmem:[#allocation2 + $0xd0] sm:$0xff]
    %v63 = vld [vmem:[#allocation2 + $0xd8] sm:$0xff]
    %v64 = vld [vmem:[#allocation2 + $0xe0] sm:$0xff]
    %v65 = vld [vmem:[#allocation2 + $0xe8] sm:$0xff]
    %v66 = vld [vmem:[#allocation2 + $0xf0] sm:$0xff]
    %v67 = vld [vmem:[#allocation2 + $0xf8] sm:$0xff]
    %v68 = vld [vmem:[#allocation2 + $0x100] sm:$0xff]
    %v69 = vld [vmem:[#allocation2 + $0x108] sm:$0xff]
    %v70 = vld [vmem:[#allocation2 + $0x110] sm:$0x1]
    %v71 = vperm.slane %v37, 0
    %vm72 = vcmask 64512
    %v74 = vsel %vm72, %v28, 0
    %v77 = vsel %vm72, %v29, 0
    %v80 = vsel %vm72, %v30, 0
    %v83 = vsel %vm72, %v31, 0
    %v86 = vsel %vm72, %v32, 0
    %v89 = vsel %vm72, %v33, 0
    %v92 = vsel %vm72, %v34, 0
    %v95 = vsel %vm72, %v35, 0
    %97 = vmatpush.msra.mxu0 0.0
    %98 = vmatpush.msra.mxu0 0.0
    %99 = vmatpush.msra.mxu0 0.0
    %100 = vmatpush.msra.mxu0 0.0
    %101 = vmatpush.msra.mxu0 0.0
    %102 = vmatpush.msra.mxu0 0.0
    %103 = vmatpush.msra.mxu0 0.0
    %104 = vmatpush.msra.mxu0 0.0
    %105 = vmatpush.msra.mxu0 0.0
    %106 = vmatpush.msra.mxu0 0.0
    %107 = vmatpush.msra.mxu0 0.0
    %108 = vmatpush.msra.mxu0 0.0
    %109 = vmatpush.msra.mxu0 0.0
    %110 = vmatpush.msra.mxu0 0.0
    %111 = vmatpush.msra.mxu0 0.0
    %112 = vmatpush.msra.mxu0 %v36
    %113 = vmatmul.f32.gmra.mxu0 %v74
    %v114 = vpop.f32.mrf.mxu0
    %v115 = vadd.f32 %v71, %v114
    %116 = vmatmul.f32.gmra.mxu0 %v77
    %v117 = vpop.f32.mrf.mxu0
    %v118 = vadd.f32 %v71, %v117
    %119 = vmatmul.f32.gmra.mxu0 %v80
    %v120 = vpop.f32.mrf.mxu0
    %v121 = vadd.f32 %v71, %v120
    %122 = vmatmul.f32.gmra.mxu0 %v83
    %v123 = vpop.f32.mrf.mxu0
    %v124 = vadd.f32 %v71, %v123
    %125 = vmatmul.f32.gmra.mxu0 %v86
    %v126 = vpop.f32.mrf.mxu0
    %v127 = vadd.f32 %v71, %v126
    %128 = vmatmul.f32.gmra.mxu0 %v89
    %v129 = vpop.f32.mrf.mxu0
    %v130 = vadd.f32 %v71, %v129
    %131 = vmatmul.f32.gmra.mxu0 %v92
    %v132 = vpop.f32.mrf.mxu0
    %v133 = vadd.f32 %v71, %v132
    %134 = vmatmul.f32.gmra.mxu0 %v95
    %v135 = vpop.f32.mrf.mxu0
    %v136 = vadd.f32 %v71, %v135
    %137 = vdwg.mxu0
    %v138 = vmax.f32 %v115, 0.0
    %v139 = vmax.f32 %v118, 0.0
    %v140 = vmax.f32 %v121, 0.0
    %v141 = vmax.f32 %v124, 0.0
    %v142 = vmax.f32 %v127, 0.0
    %v143 = vmax.f32 %v130, 0.0
    %v144 = vmax.f32 %v133, 0.0
    %v145 = vmax.f32 %v136, 0.0
    %146 = vmatpush.msra.mxu0 %v53
    %147 = vmatpush.msra.mxu0 %v52
    %148 = vmatpush.msra.mxu0 %v51
    %149 = vmatpush.msra.mxu0 %v50
    %150 = vmatpush.msra.mxu0 %v49
    %151 = vmatpush.msra.mxu0 %v48
    %152 = vmatpush.msra.mxu0 %v47
    %153 = vmatpush.msra.mxu0 %v46
    %154 = vmatpush.msra.mxu0 %v45
    %155 = vmatpush.msra.mxu0 %v44
    %156 = vmatpush.msra.mxu0 %v43
    %157 = vmatpush.msra.mxu0 %v42
    %158 = vmatpush.msra.mxu0 %v41
    %159 = vmatpush.msra.mxu0 %v40
    %160 = vmatpush.msra.mxu0 %v39
    %161 = vmatpush.msra.mxu0 %v38
    %162 = vmatmul.f32.gmra.mxu0 %v138
    %v163 = vpop.f32.mrf.mxu0
    %v164 = vadd.f32 0.0, %v163
    %165 = vmatmul.f32.gmra.mxu0 %v139
    %v166 = vpop.f32.mrf.mxu0
    %v167 = vadd.f32 0.0, %v166
    %168 = vmatmul.f32.gmra.mxu0 %v140
    %v169 = vpop.f32.mrf.mxu0
    %v170 = vadd.f32 0.0, %v169
    %171 = vmatmul.f32.gmra.mxu0 %v141
    %v172 = vpop.f32.mrf.mxu0
    %v173 = vadd.f32 0.0, %v172
    %174 = vmatmul.f32.gmra.mxu0 %v142
    %v175 = vpop.f32.mrf.mxu0
    %v176 = vadd.f32 0.0, %v175
    %177 = vmatmul.f32.gmra.mxu0 %v143
    %v178 = vpop.f32.mrf.mxu0
    %v179 = vadd.f32 0.0, %v178
    %180 = vmatmul.f32.gmra.mxu0 %v144
    %v181 = vpop.f32.mrf.mxu0
    %v182 = vadd.f32 0.0, %v181
    %183 = vmatmul.f32.gmra.mxu0 %v145
    %v184 = vpop.f32.mrf.mxu0
    %v185 = vadd.f32 0.0, %v184
    %186 = vdwg.mxu0
    %v187 = vmax.f32 %v164, 0.0
    %v188 = vmax.f32 %v167, 0.0
    %v189 = vmax.f32 %v170, 0.0
    %v190 = vmax.f32 %v173, 0.0
    %v191 = vmax.f32 %v176, 0.0
    %v192 = vmax.f32 %v179, 0.0
    %v193 = vmax.f32 %v182, 0.0
    %v194 = vmax.f32 %v185, 0.0
    %v195 = vperm.slane %v70, 0
    %196 = vmatpush.msra.mxu0 %v69
    %197 = vmatpush.msra.mxu0 %v68
    %198 = vmatpush.msra.mxu0 %v67
    %199 = vmatpush.msra.mxu0 %v66
    %200 = vmatpush.msra.mxu0 %v65
    %201 = vmatpush.msra.mxu0 %v64
    %202 = vmatpush.msra.mxu0 %v63
    %203 = vmatpush.msra.mxu0 %v62
    %204 = vmatpush.msra.mxu0 %v61
    %205 = vmatpush.msra.mxu0 %v60
    %206 = vmatpush.msra.mxu0 %v59
    %207 = vmatpush.msra.mxu0 %v58
    %208 = vmatpush.msra.mxu0 %v57
    %209 = vmatpush.msra.mxu0 %v56
    %210 = vmatpush.msra.mxu0 %v55
    %211 = vmatpush.msra.mxu0 %v54
    %212 = vmatmul.f32.gmra.mxu0 %v187
    %v213 = vpop.f32.mrf.mxu0
    %v214 = vadd.f32 %v195, %v213
    %215 = vmatmul.f32.gmra.mxu0 %v188
    %v216 = vpop.f32.mrf.mxu0
    %v217 = vadd.f32 %v195, %v216
    %218 = vmatmul.f32.gmra.mxu0 %v189
    %v219 = vpop.f32.mrf.mxu0
    %v220 = vadd.f32 %v195, %v219
    %221 = vmatmul.f32.gmra.mxu0 %v190
    %v222 = vpop.f32.mrf.mxu0
    %v223 = vadd.f32 %v195, %v222
    %224 = vmatmul.f32.gmra.mxu0 %v191
    %v225 = vpop.f32.mrf.mxu0
    %v226 = vadd.f32 %v195, %v225
    %227 = vmatmul.f32.gmra.mxu0 %v192
    %v228 = vpop.f32.mrf.mxu0
    %v229 = vadd.f32 %v195, %v228
    %230 = vmatmul.f32.gmra.mxu0 %v193
    %v231 = vpop.f32.mrf.mxu0
    %v232 = vadd.f32 %v195, %v231
    %233 = vmatmul.f32.gmra.mxu0 %v194
    %v234 = vpop.f32.mrf.mxu0
    %v235 = vadd.f32 %v195, %v234
    %236 = vdwg.mxu0
    %237 = vst [vmem:[#allocation5] sm:$0xff] %v214
    %238 = vst [vmem:[#allocation5 + $0x8] sm:$0xff] %v217
    %239 = vst [vmem:[#allocation5 + $0x10] sm:$0xff] %v220
    %240 = vst [vmem:[#allocation5 + $0x18] sm:$0xff] %v223
    %241 = vst [vmem:[#allocation5 + $0x20] sm:$0xff] %v226
    %242 = vst [vmem:[#allocation5 + $0x28] sm:$0xff] %v229
    %243 = vst [vmem:[#allocation5 + $0x30] sm:$0xff] %v232
    %244 = vst [vmem:[#allocation5 + $0x38] sm:$0xff] %v235
    // Predicated region
    $region14: #{tpu_custom_call.1} parent=1 // pred_check
      _
    $region15: #{tpu_custom_call.1} parent=1 // pred_check_branch
      %246 = sbr.rel (0) target = $region17
    $region16: #{tpu_custom_call.1} parent=1 // pred_region
      %248 = vsyncadd [#allocation4], 0
      %s249 = sshll.u32 [#allocation5], 4
      %s250 = int_to_ptr.vmem [resolvable:$true] %s249
      %s251 = sshll.u32 %s2, 4
      %s252 = int_to_ptr.hbm [resolvable:$true] %s251
      %257 = dma.vmem_to_hbm [thread:$0]  %s250, 1024, %s252, [#allocation4], 128, 128, 8
    $region17: #{tpu_custom_call.1} parent=1 // pred_fallthru
      _
    // Predicated region
    $region18: #{tpu_custom_call.1} parent=1 // pred_check
      _
    $region19: #{tpu_custom_call.1} parent=1 // pred_check_branch
      %259 = sbr.rel (0) target = $region21
    $region20: #{tpu_custom_call.1} parent=1 // pred_region
      %261 = dma.done [#allocation4], 1024
    $region21: #{tpu_custom_call.1} parent=1 // pred_fallthru
      _
    %262 = vsyncpa [#allocation3], 1
    %263 = vsyncpa [#allocation4], 1

</llo_original>
